<compile_context>
chip_gen: v5e
topology: v5e:2x2
jax: 0.10.0
libtpu: 0.0.40
codegen_flags: <defaults>
</compile_context>

<pallas_src>
import functools

import jax
import jax.numpy as jnp
from jax.experimental import pallas as pl
from jax.experimental.pallas import tpu as pltpu


# ---------------------------------------------------------------------------
# Helpers
# ---------------------------------------------------------------------------

def _shift(x, s, axis):
    """Full-shape copy of x shifted by s along a sublane/lane axis (XLU roll).

    Interior positions hold x[..., i + s, ...]; border positions wrap and are
    masked out later.  Every use below pairs +s with -s under abs()/square(),
    so the result is independent of the roll direction convention.
    """
    n = x.shape[axis]
    return pltpu.roll(x, (-s) % n, axis)


def _round_up(v, m):
    return ((v + m - 1) // m) * m


# ---------------------------------------------------------------------------
# Kernels
# ---------------------------------------------------------------------------

def _gradient_kernel(x_ref, out_ref, *, flag_l1):
    """Per-block partial sum of the (unscaled) gradient-l1/l2 integrand."""
    tb, X, Y, Z = x_ref.shape

    def slab_partial(i):
        x = x_ref[i].astype(jnp.float32)              # (X, Y, Z)
        xm = x[1:-1]                                   # interior rows along X
        dx = x[2:] - x[:-2]                            # raw 2*dT/dx
        dy = _shift(xm, 1, 1) - _shift(xm, -1, 1)      # raw 2*dT/dy (sublane)
        dz = _shift(xm, 1, 2) - _shift(xm, -1, 2)      # raw 2*dT/dz (lane)
        if flag_l1:
            t = jnp.abs(dx) + jnp.abs(dy) + jnp.abs(dz)
        else:
            t = dx * dx + dy * dy + dz * dz
        return jnp.sum(t, axis=0)                      # (Y, Z)

    acc = jax.lax.fori_loop(
        0, tb, lambda i, a: a + slab_partial(i),
        jnp.zeros((Y, Z), jnp.float32), unroll=(tb <= 4))

    jj = jax.lax.broadcasted_iota(jnp.int32, (Y, Z), 0)
    kk = jax.lax.broadcasted_iota(jnp.int32, (Y, Z), 1)
    interior = (jj >= 1) & (jj <= Y - 2) & (kk >= 1) & (kk <= Z - 2)
    out_ref[0] = jnp.where(interior, acc, 0.0)


def _bending_kernel(x_ref, out_ref):
    """Per-block partial sum of the (unscaled) bending-energy integrand."""
    tb, X, Y, Z = x_ref.shape

    def slab_partial(i):
        x = x_ref[i].astype(jnp.float32)               # (X, Y, Z)
        xc = x[2:-2]                                   # center rows along X
        c2 = xc + xc                                   # hoisted 2*x[i,j,k]
        dxx = (x[4:] + x[:-4]) - c2                    # raw 4*dTdxx
        dyy = (_shift(xc, 2, 1) + _shift(xc, -2, 1)) - c2
        dzz = (_shift(xc, 2, 2) + _shift(xc, -2, 2)) - c2
        diag = dxx * dxx + dyy * dyy + dzz * dzz
        d = x[3:-1] - x[1:-3]                          # raw 2*dTdx (x-shift)
        dxy = _shift(d, 1, 1) - _shift(d, -1, 1)       # raw 4*dTdxy
        dxz = _shift(d, 1, 2) - _shift(d, -1, 2)       # raw 4*dTdxz
        e = _shift(xc, 1, 1) - _shift(xc, -1, 1)       # raw 2*dTdy (y-shift)
        dyz = _shift(e, 1, 2) - _shift(e, -1, 2)       # raw 4*dTdyz
        cross = dxy * dxy + dxz * dxz + dyz * dyz
        # Fold the "2*" of the cross terms into the (Y, Z)-sized reduction.
        return jnp.sum(diag, axis=0) + 2.0 * jnp.sum(cross, axis=0)

    acc = jax.lax.fori_loop(
        0, tb, lambda i, a: a + slab_partial(i),
        jnp.zeros((Y, Z), jnp.float32), unroll=(tb <= 4))

    jj = jax.lax.broadcasted_iota(jnp.int32, (Y, Z), 0)
    kk = jax.lax.broadcasted_iota(jnp.int32, (Y, Z), 1)
    interior = (jj >= 2) & (jj <= Y - 3) & (kk >= 2) & (kk <= Z - 3)
    out_ref[0] = jnp.where(interior, acc, 0.0)


# ---------------------------------------------------------------------------
# Block sizing
# ---------------------------------------------------------------------------

def _pick_block_size(nc, X, Y, Z, in_itemsize, energy_type):
    """Pick tb (a divisor of nc) and the scoped-VMEM limit to request."""
    try:
        cap = int(getattr(pltpu.get_tpu_info(), "vmem_capacity_bytes",
                          64 << 20))
    except Exception:                      # not on TPU / info unavailable
        cap = 64 << 20
    # ~64 MiB working limit on v5e/v6e (128 MiB VMEM), ~32 MiB on v7x (64 MiB).
    vmem_limit = max(16 << 20, min(64 << 20, cap // 2))
    budget = (vmem_limit * 3) // 4         # headroom for compiler scratch

    # Footprints use the padded (sublane x lane) layout sizes.
    padded = X * _round_up(Y, 8) * _round_up(Z, 128)
    slab_in = padded * in_itemsize         # per-slab input (double-buffered)
    slab_f32 = padded * 4                  # per-slab f32 temporaries
    k_temps = 12 if energy_type == "bending" else 6
    avail = budget - k_temps * slab_f32
    tb_vmem = max(1, avail // (2 * slab_in)) if avail > 0 else 1
    # Keep >= 4 grid steps when possible (v7x 2-TC split + pipeline depth).
    tb_cap = int(max(1, min(nc, tb_vmem, max(1, nc // 4))))
    # Largest divisor of nc not exceeding the cap -> no padding copy needed.
    tb = max(d for d in range(1, tb_cap + 1) if nc % d == 0)
    return tb, int(vmem_limit)


# ---------------------------------------------------------------------------
# Wrapper
# ---------------------------------------------------------------------------

def displacement_regularizer(disp, _unused=None, *, energy_type):
    """Pallas equivalent of DisplacementRegularizer(energy_type)(disp, _)."""
    if energy_type not in ("bending", "gradient-l2", "gradient-l1"):
        raise Exception("Not recognised local regulariser!")
    N, C, X, Y, Z = disp.shape
    assert C == 3, "displacement field must have 3 components"
    crop = 4 if energy_type == "bending" else 2
    assert X > crop and Y > crop and Z > crop

    nc = N * C
    x = disp.reshape(nc, X, Y, Z)

    # Put the largest spatial dim on the lane axis when it is not already
    # there (energy is symmetric under permuting x/y/z spatial axes).
    dims = (X, Y, Z)
    big = max(range(3), key=lambda a: dims[a])
    if dims[big] > Z:
        perm = [0, 1, 2]
        perm[big], perm[2] = perm[2], perm[big]
        x = jnp.transpose(x, (0, 1 + perm[0], 1 + perm[1], 1 + perm[2]))
        X, Y, Z = dims[perm[0]], dims[perm[1]], dims[perm[2]]

    tb, vmem_limit = _pick_block_size(
        nc, X, Y, Z, jnp.dtype(x.dtype).itemsize, energy_type)
    nblocks = nc // tb                      # exact: tb divides nc

    if energy_type == "bending":
        kernel = _bending_kernel
    else:
        kernel = functools.partial(
            _gradient_kernel, flag_l1=(energy_type == "gradient-l1"))

    partials = pl.pallas_call(
        kernel,
        out_shape=jax.ShapeDtypeStruct((nblocks, Y, Z), jnp.float32),
        grid_spec=pltpu.PrefetchScalarGridSpec(
            num_scalar_prefetch=0,
            grid=(nblocks,),
            in_specs=[pl.BlockSpec((tb, X, Y, Z), lambda i: (i, 0, 0, 0))],
            out_specs=pl.BlockSpec((1, Y, Z), lambda i: (i, 0, 0)),
        ),
        compiler_params=pltpu.CompilerParams(
            # Independent per-block partials -> both v7x TensorCores can run.
            dimension_semantics=("parallel",),
            vmem_limit_bytes=vmem_limit,
        ),
    )(x)

    count = nc * (X - crop) * (Y - crop) * (Z - crop)
    total = jnp.sum(partials)
    if energy_type == "bending":
        # raw second differences carry a deferred 1/4 each -> 1/16 on squares.
        return total * (1.0 / 16.0) / count
    # raw first differences carry a deferred 1/2 -> 1/4 on squares, 1/2 on abs.
    scale = 0.5 if energy_type == "gradient-l1" else 0.25
    return total * scale / (count * 3.0)


# ---------------------------------------------------------------------------
# Pure-JAX reference (literal transcription of the PyTorch module)
# ---------------------------------------------------------------------------

def _reference(disp, energy_type):
    def gdx(fv): return (fv[:, 2:, 1:-1, 1:-1] - fv[:, :-2, 1:-1, 1:-1]) / 2
    def gdy(fv): return (fv[:, 1:-1, 2:, 1:-1] - fv[:, 1:-1, :-2, 1:-1]) / 2
    def gdz(fv): return (fv[:, 1:-1, 1:-1, 2:] - fv[:, 1:-1, 1:-1, :-2]) / 2
    def gtxyz(T, fn): return jnp.stack([fn(T[:, i]) for i in (0, 1, 2)], axis=1)

    dTdx = gtxyz(disp, gdx)
    dTdy = gtxyz(disp, gdy)
    dTdz = gtxyz(disp, gdz)
    if energy_type == "bending":
        dTdxx = gtxyz(dTdx, gdx)
        dTdyy = gtxyz(dTdy, gdy)
        dTdzz = gtxyz(dTdz, gdz)
        dTdxy = gtxyz(dTdx, gdy)
        dTdyz = gtxyz(dTdy, gdz)
        dTdxz = gtxyz(dTdx, gdz)
        return jnp.mean(dTdxx ** 2 + dTdyy ** 2 + dTdzz ** 2
                        + 2 * dTdxy ** 2 + 2 * dTdxz ** 2 + 2 * dTdyz ** 2)
    if energy_type == "gradient-l1":
        norms = jnp.abs(dTdx) + jnp.abs(dTdy) + jnp.abs(dTdz)
    else:
        norms = dTdx ** 2 + dTdy ** 2 + dTdz ** 2
    return jnp.mean(norms) / 3.0


if __name__ == "__main__":
    key = jax.random.PRNGKey(0)
    k1, k2 = jax.random.split(key)
    disp = jax.random.normal(k1, (2, 3, 16, 16, 16), dtype=jnp.float32)
    dummy = jax.random.normal(k2, (2, 3, 16, 16, 16), dtype=jnp.float32)  # unused `_`

    for energy_type in ("gradient-l1", "gradient-l2", "bending"):
        out = displacement_regularizer(disp, dummy, energy_type=energy_type)
        out = jax.block_until_ready(out)
        ref = _reference(disp, energy_type)
        assert jnp.allclose(out, ref, rtol=2e-4, atol=1e-6), (energy_type, out, ref)

    print("KERNEL_OK")
</pallas_src>

<mosaic_0001>
module attributes {stable_mosaic.version = 11 : i64} {
  func.func @_gradient_kernel(%arg0: i32, %arg1: memref<1x16x16x16xf32, #tpu.memory_space<vmem>>, %arg2: memref<1x16x16xf32, #tpu.memory_space<vmem>>) attributes {dimension_semantics = [#tpu.dimension_semantics<parallel>], iteration_bounds = array<i64: 6>, scalar_prefetch = 0 : i64, scratch_operands = 0 : i64, tpu.core_type = #tpu.core_type<tc>, window_params = [{transform_indices = @transform_0, window_bounds = array<i64: 1, 16, 16, 16>}, {transform_indices = @transform_1, window_bounds = array<i64: 1, 16, 16>}]} {
    %cst = arith.constant 0.000000e+00 : f32
    %0 = vector.broadcast %cst : f32 to vector<16x16xf32>
    %c0_i32 = arith.constant 0 : i32
    %1 = arith.index_cast %c0_i32 : i32 to index
    %c0 = arith.constant 0 : index
    %c0_0 = arith.constant 0 : index
    %c0_1 = arith.constant 0 : index
    %2 = vector.load %arg1[%1, %c0, %c0_0, %c0_1] : memref<1x16x16x16xf32, #tpu.memory_space<vmem>>, vector<1x16x16x16xf32>
    %3 = vector.shape_cast %2 : vector<1x16x16x16xf32> to vector<16x16x16xf32>
    %4 = vector.extract_strided_slice %3 {offsets = [1, 0, 0], sizes = [14, 16, 16], strides = [1, 1, 1]} : vector<16x16x16xf32> to vector<14x16x16xf32>
    %5 = vector.extract_strided_slice %3 {offsets = [2, 0, 0], sizes = [14, 16, 16], strides = [1, 1, 1]} : vector<16x16x16xf32> to vector<14x16x16xf32>
    %6 = vector.extract_strided_slice %3 {offsets = [0, 0, 0], sizes = [14, 16, 16], strides = [1, 1, 1]} : vector<16x16x16xf32> to vector<14x16x16xf32>
    %7 = arith.subf %5, %6 : vector<14x16x16xf32>
    %c15_i32 = arith.constant 15 : i32
    %8 = tpu.dynamic_rotate %4 by %c15_i32 dim 1 : vector<14x16x16xf32>, i32 -> vector<14x16x16xf32>
    %c1_i32 = arith.constant 1 : i32
    %9 = tpu.dynamic_rotate %4 by %c1_i32 dim 1 : vector<14x16x16xf32>, i32 -> vector<14x16x16xf32>
    %10 = arith.subf %8, %9 : vector<14x16x16xf32>
    %c15_i32_2 = arith.constant 15 : i32
    %11 = tpu.dynamic_rotate %4 by %c15_i32_2 dim 2 : vector<14x16x16xf32>, i32 -> vector<14x16x16xf32>
    %c1_i32_3 = arith.constant 1 : i32
    %12 = tpu.dynamic_rotate %4 by %c1_i32_3 dim 2 : vector<14x16x16xf32>, i32 -> vector<14x16x16xf32>
    %13 = arith.subf %11, %12 : vector<14x16x16xf32>
    %14 = math.absf %7 : vector<14x16x16xf32>
    %15 = math.absf %10 : vector<14x16x16xf32>
    %16 = arith.addf %14, %15 : vector<14x16x16xf32>
    %17 = math.absf %13 : vector<14x16x16xf32>
    %18 = arith.addf %16, %17 : vector<14x16x16xf32>
    %cst_4 = arith.constant dense<0.000000e+00> : vector<16x16xf32>
    %19 = vector.multi_reduction <add>, %18, %cst_4 [0] : vector<14x16x16xf32> to vector<16x16xf32>
    %20 = arith.addf %0, %19 : vector<16x16xf32>
    %c1_i32_5 = arith.constant 1 : i32
    %21 = tpu.iota {dimensions = array<i32: 0>} : vector<16x16xi32>
    %22 = tpu.iota {dimensions = array<i32: 1>} : vector<16x16xi32>
    %c1_i32_6 = arith.constant 1 : i32
    %23 = vector.broadcast %c1_i32_6 : i32 to vector<16x16xi32>
    %24 = arith.cmpi sge, %21, %23 : vector<16x16xi32>
    %c14_i32 = arith.constant 14 : i32
    %25 = vector.broadcast %c14_i32 : i32 to vector<16x16xi32>
    %26 = arith.cmpi sle, %21, %25 : vector<16x16xi32>
    %27 = arith.andi %24, %26 : vector<16x16xi1>
    %c1_i32_7 = arith.constant 1 : i32
    %28 = vector.broadcast %c1_i32_7 : i32 to vector<16x16xi32>
    %29 = arith.cmpi sge, %22, %28 : vector<16x16xi32>
    %30 = arith.andi %27, %29 : vector<16x16xi1>
    %c14_i32_8 = arith.constant 14 : i32
    %31 = vector.broadcast %c14_i32_8 : i32 to vector<16x16xi32>
    %32 = arith.cmpi sle, %22, %31 : vector<16x16xi32>
    %33 = arith.andi %30, %32 : vector<16x16xi1>
    %cst_9 = arith.constant 0.000000e+00 : f32
    %34 = vector.broadcast %cst_9 : f32 to vector<16x16xf32>
    %35 = arith.select %33, %20, %34 : vector<16x16xi1>, vector<16x16xf32>
    %c0_10 = arith.constant 0 : index
    %c0_11 = arith.constant 0 : index
    %c0_12 = arith.constant 0 : index
    %36 = vector.load %arg2[%c0_10, %c0_11, %c0_12] : memref<1x16x16xf32, #tpu.memory_space<vmem>>, vector<1x16x16xf32>
    %37 = vector.shape_cast %36 : vector<1x16x16xf32> to vector<16x16xf32>
    %38 = vector.shape_cast %35 : vector<16x16xf32> to vector<1x16x16xf32>
    tpu.vector_store %arg2[%c0_10, %c0_11, %c0_12], %38 {strides = array<i32>} : memref<1x16x16xf32, #tpu.memory_space<vmem>>, vector<1x16x16xf32>,
    return
  }
  func.func @transform_0(%arg0: i32) -> (i32, i32, i32, i32) {
    %c0_i32 = arith.constant 0 : i32
    %c0_i32_0 = arith.constant 0 : i32
    %c0_i32_1 = arith.constant 0 : i32
    %c0_i32_2 = arith.constant 0 : i32
    return %arg0, %c0_i32, %c0_i32_0, %c0_i32_1 : i32, i32, i32, i32
  }
  func.func @transform_1(%arg0: i32) -> (i32, i32, i32) {
    %c0_i32 = arith.constant 0 : i32
    %c0_i32_0 = arith.constant 0 : i32
    %c0_i32_1 = arith.constant 0 : i32
    return %arg0, %c0_i32, %c0_i32_0 : i32, i32, i32
  }
}

</mosaic_0001>

<llo_original>
// kernel: tpu_custom_call.1
$region0: #{tpu_custom_call.1}
  #allocation0 [shape = 'u32[]', space=smem, size = 0x4, offset = 0x4, fixed_abs, tag = 'smem constant byte address 0x4 - core index']
  #allocation1 [shape = 'u32[72,128]{1,0:T(1,128)}', space=vmem, size = 0x9000, scoped, tag = 'internal scratch']
  %s0 = inlined_call_operand.hbm [shape: f32[6,16,16,16], index: 0, kind: input, shape index: {}]
  %s1 = inlined_call_operand.hbm [shape: f32[6,16,16], index: 1, kind: output, shape index: {}]
  %s2 = sld [smem:[#allocation0]]
  $region41: #{tpu_custom_call.1} parent=0
    _
  %s4 = ssub.s32 1, %s2
  %s5 = scalar_select 0, %s4, %s2
  $region1: #{tpu_custom_call.1} parent=0
    #allocation2 [shape = 'u8[262144]{0}', space=vmem, size = 0x40000, scoped, tag = 'input window, operand 0']
    #allocation3 [shape = 's32[2]{0}', space=sflag, size = 0x8, scoped, tag = 'scoped memory for tpu_custom_call.1']
    #allocation4 [shape = 's32[2]{0}', space=sflag, size = 0x8, scoped, tag = 'scoped memory for tpu_custom_call.1']
    #allocation5 [shape = 'u8[16384]{0}', space=vmem, size = 0x4000, scoped, tag = 'output window, operand 0']
    %6 = vsyncpa [#allocation3], 0
    %s7 = scalar_lea.sflag [#allocation3], 1
    %8 = vsyncpa %s7, 0
    %9 = vsyncpa [#allocation4], 0
    %s10 = scalar_lea.sflag [#allocation4], 1
    %11 = vsyncpa %s10, 0
    loop: start=0, step=1, limit=8
    $region2: #{tpu_custom_call.1} parent=1 // loop_pre_header
      _
    $region3: #{tpu_custom_call.1} parent=1 // loop_header
      %s13 = sphi 0, %s17
      %p14 = scmp.ge.s32.totalorder %s13, 8
      %s23 = sphi 0, %s25
      %s26 = sphi 0, %s23
      %s27 = sphi 0, %s26
      %s43 = sphi 0, %s27
      %s49 = sphi 0, %s51
      %s52 = sphi 0, %s49
      %s53 = sphi 0, %s52
      %s69 = sphi 0, %s53
    $region4: #{tpu_custom_call.1} parent=1 // loop_header_branch
      %16 = sbr.rel (%p14) target = $region8
    $region5: #{tpu_custom_call.1} parent=1 // loop_body
      %s18 = ssub.s32 %s13, 1
      %s19 = ssub.s32 %s13, 2
      %s20 = sadd.s32 %s13, 1
      %s21 = ssub.s32 %s13, %s20
      %p22 = scmp.eq.s32.totalorder %s21, 0
      %s24 = sadd.s32 %s23, 1
      %s25 = scalar_select %p22, %s23, %s24
      %p28 = pneg %p22
      %p29 = scmp.eq.s32.totalorder %s13, 5
      %p30 = por %p28, %p29
      %p31 = scmp.ne.s32.totalorder %s23, %s26
      %p32 = scmp.eq.s32.totalorder %s13, 0
      %p33 = por %p31, %p32
      %p34 = scmp.ne.s32.totalorder %s23, %s26
      %p35 = scmp.eq.s32.totalorder %s18, 5
      %p36 = por %p34, %p35
      %p37 = scmp.ne.s32.totalorder %s26, %s27
      %p38 = scmp.eq.s32.totalorder %s18, 0
      %p39 = por %p37, %p38
      %p40 = scmp.ne.s32.totalorder %s26, %s27
      %p41 = scmp.eq.s32.totalorder %s19, 5
      %p42 = por %p40, %p41
      %p44 = scmp.ne.s32.totalorder %s27, %s43
      %p45 = scmp.eq.s32.totalorder %s19, 0
      %p46 = por %p44, %p45
      %s47 = ssub.s32 %s13, %s20
      %p48 = scmp.eq.s32.totalorder %s47, 0
      %s50 = sadd.s32 %s49, 1
      %s51 = scalar_select %p48, %s49, %s50
      %p54 = pneg %p48
      %p55 = scmp.eq.s32.totalorder %s13, 5
      %p56 = por %p54, %p55
      %p57 = scmp.ne.s32.totalorder %s49, %s52
      %p58 = scmp.eq.s32.totalorder %s13, 0
      %p59 = por %p57, %p58
      %p60 = scmp.ne.s32.totalorder %s49, %s52
      %p61 = scmp.eq.s32.totalorder %s18, 5
      %p62 = por %p60, %p61
      %p63 = scmp.ne.s32.totalorder %s52, %s53
      %p64 = scmp.eq.s32.totalorder %s18, 0
      %p65 = por %p63, %p64
      %p66 = scmp.ne.s32.totalorder %s52, %s53
      %p67 = scmp.eq.s32.totalorder %s19, 5
      %p68 = por %p66, %p67
      %p70 = scmp.ne.s32.totalorder %s53, %s69
      %p71 = scmp.eq.s32.totalorder %s19, 0
      %p72 = por %p70, %p71
      %p73 = scmp.le.s32.totalorder 1, %s13
      %p74 = scmp.lt.s32.totalorder %s13, 7
      %p75 = pnand %p73, %p74
      %p76 = pneg %p75
      // Predicated region
      $region9: #{tpu_custom_call.1} parent=5 // pred_check
        _
      $region10: #{tpu_custom_call.1} parent=5 // pred_check_branch
        %78 = sbr.rel (%p75) target = $region12
      $region11: #{tpu_custom_call.1} parent=5 // pred_region
        %s79 = ssub.s32 %s13, 1
      $region12: #{tpu_custom_call.1} parent=5 // pred_fallthru
        _
      %p80 = scmp.lt.s32.totalorder %s13, 6
      // Predicated region
      $region13: #{tpu_custom_call.1} parent=5 // pred_check
        %p81 = pneg %p80
      $region14: #{tpu_custom_call.1} parent=5 // pred_check_branch
        %83 = sbr.rel (%p81) target = $region16
      $region15: #{tpu_custom_call.1} parent=5 // pred_region
        // Predicated region
        $region17: #{tpu_custom_call.1} parent=15 // pred_check
          %p84 = pneg %p33
        $region18: #{tpu_custom_call.1} parent=15 // pred_check_branch
          %86 = sbr.rel (%p84) target = $region20
        $region19: #{tpu_custom_call.1} parent=15 // pred_region
          %s87 = sand.u32 %s23, 1
          %s88 = scalar_lea.sflag [#allocation3], %s87
          %s89 = sand.u32 %s23, 1
          %s90 = smul.addr %s89, 256
          %s91 = scalar_lea.vmem [#allocation2], %s90
          %93 = vsyncadd %s88, 0
          %s94 = smul.addr %s13, 32
          %s95 = smul.addr %s94, 8
          %s96 = scalar_lea.hbm %s0, %s95
          %s97 = sshll.u32 %s96, 4
          %s98 = int_to_ptr.hbm [resolvable:$true] %s97
          %s99 = sshll.u32 %s91, 4
          %s100 = int_to_ptr.vmem [resolvable:$true] %s99
          %105 = dma.hbm_to_vmem [thread:$0]  %s98, 4096, %s100, %s88, 128, 128, 8
        $region20: #{tpu_custom_call.1} parent=15 // pred_fallthru
          _
      $region16: #{tpu_custom_call.1} parent=5 // pred_fallthru
        _
      %p106 = scmp.le.s32.totalorder 1, %s13
      %p107 = scmp.lt.s32.totalorder %s13, 7
      %p108 = pnand %p106, %p107
      %p109 = pneg %p108
      // Predicated region
      $region21: #{tpu_custom_call.1} parent=5 // pred_check
        _
      $region22: #{tpu_custom_call.1} parent=5 // pred_check_branch
        %111 = sbr.rel (%p108) target = $region24
      $region23: #{tpu_custom_call.1} parent=5 // pred_region
        %s112 = ssub.s32 %s13, 1
        %s113 = sand.u32 %s26, 1
        %s114 = scalar_lea.sflag [#allocation3], %s113
        %s115 = sand.u32 %s26, 1
        %s116 = smul.addr %s115, 256
        %s117 = scalar_lea.vmem [#allocation2], %s116
        // Predicated region
        $region25: #{tpu_custom_call.1} parent=23 // pred_check
          %p118 = pneg %p39
        $region26: #{tpu_custom_call.1} parent=23 // pred_check_branch
          %120 = sbr.rel (%p118) target = $region28
        $region27: #{tpu_custom_call.1} parent=23 // pred_region
          %122 = dma.done %s114, 4096
        $region28: #{tpu_custom_call.1} parent=23 // pred_fallthru
          _
        %s123 = sand.u32 %s26, 1
        %s124 = scalar_lea.sflag [#allocation3], %s123
        %s125 = sand.u32 %s26, 1
        %s126 = smul.addr %s125, 256
        %s127 = scalar_lea.vmem [#allocation2], %s126
        %p128 = pneg %p39
        %p129 = pneg %p36
        %p130 = pneg %p65
        %p131 = pneg %p62
        %s132 = sand.u32 %s52, 1
        %s133 = scalar_lea.sflag [#allocation4], %s132
        %s134 = sand.u32 %s52, 1
        %s135 = smul.addr %s134, 16
        %s136 = scalar_lea.vmem [#allocation5], %s135
        %v137 = vld [vmem:[%s117] sm:$0xff]
        %v138 = vld [vmem:[%s117 + $0x8] sm:$0xff]
        %v139 = vld [vmem:[%s117 + $0x10] sm:$0xff]
        %v140 = vld [vmem:[%s117 + $0x18] sm:$0xff]
        %v141 = vld [vmem:[%s117 + $0x20] sm:$0xff]
        %v142 = vld [vmem:[%s117 + $0x28] sm:$0xff]
        %v143 = vld [vmem:[%s117 + $0x30] sm:$0xff]
        %v144 = vld [vmem:[%s117 + $0x38] sm:$0xff]
        %v145 = vld [vmem:[%s117 + $0x40] sm:$0xff]
        %v146 = vld [vmem:[%s117 + $0x48] sm:$0xff]
        %v147 = vld [vmem:[%s117 + $0x50] sm:$0xff]
        %v148 = vld [vmem:[%s117 + $0x58] sm:$0xff]
        %v149 = vld [vmem:[%s117 + $0x60] sm:$0xff]
        %v150 = vld [vmem:[%s117 + $0x68] sm:$0xff]
        %v151 = vld [vmem:[%s117 + $0x70] sm:$0xff]
        %v152 = vld [vmem:[%s117 + $0x78] sm:$0xff]
        %v153 = vld [vmem:[%s117 + $0x80] sm:$0xff]
        %v154 = vld [vmem:[%s117 + $0x88] sm:$0xff]
        %v155 = vld [vmem:[%s117 + $0x90] sm:$0xff]
        %v156 = vld [vmem:[%s117 + $0x98] sm:$0xff]
        %v157 = vld [vmem:[%s117 + $0xa0] sm:$0xff]
        %v158 = vld [vmem:[%s117 + $0xa8] sm:$0xff]
        %v159 = vld [vmem:[%s117 + $0xb0] sm:$0xff]
        %v160 = vld [vmem:[%s117 + $0xb8] sm:$0xff]
        %v161 = vld [vmem:[%s117 + $0xc0] sm:$0xff]
        %v162 = vld [vmem:[%s117 + $0xc8] sm:$0xff]
        %v163 = vld [vmem:[%s117 + $0xd0] sm:$0xff]
        %v164 = vld [vmem:[%s117 + $0xd8] sm:$0xff]
        %v165 = vld [vmem:[%s117 + $0xe0] sm:$0xff]
        %v166 = vld [vmem:[%s117 + $0xe8] sm:$0xff]
        %v167 = vld [vmem:[%s117 + $0xf0] sm:$0xff]
        %v168 = vld [vmem:[%s117 + $0xf8] sm:$0xff]
        %v169 = vsub.f32 %v141, %v137
        %v170 = vsub.f32 %v142, %v138
        %v171 = vsub.f32 %v143, %v139
        %v172 = vsub.f32 %v144, %v140
        %v173 = vsub.f32 %v145, %v141
        %v174 = vsub.f32 %v146, %v142
        %v175 = vsub.f32 %v147, %v143
        %v176 = vsub.f32 %v148, %v144
        %v177 = vsub.f32 %v149, %v145
        %v178 = vsub.f32 %v150, %v146
        %v179 = vsub.f32 %v151, %v147
        %v180 = vsub.f32 %v152, %v148
        %v181 = vsub.f32 %v153, %v149
        %v182 = vsub.f32 %v154, %v150
        %v183 = vsub.f32 %v155, %v151
        %v184 = vsub.f32 %v156, %v152
        %v185 = vsub.f32 %v157, %v153
        %v186 = vsub.f32 %v158, %v154
        %v187 = vsub.f32 %v159, %v155
        %v188 = vsub.f32 %v160, %v156
        %v189 = vsub.f32 %v161, %v157
        %v190 = vsub.f32 %v162, %v158
        %v191 = vsub.f32 %v163, %v159
        %v192 = vsub.f32 %v164, %v160
        %v193 = vsub.f32 %v165, %v161
        %v194 = vsub.f32 %v166, %v162
        %v195 = vsub.f32 %v167, %v163
        %v196 = vsub.f32 %v168, %v164
        %v197 = vrot.slane %v139, 1
        %v198 = vrot.slane %v141, 1
        %v199 = vrot.slane %v143, 1
        %v200 = vrot.slane %v145, 1
        %v201 = vrot.slane %v147, 1
        %v202 = vrot.slane %v149, 1
        %v203 = vrot.slane %v151, 1
        %v204 = vrot.slane %v153, 1
        %v205 = vrot.slane %v155, 1
        %v206 = vrot.slane %v157, 1
        %v207 = vrot.slane %v159, 1
        %v208 = vrot.slane %v161, 1
        %v209 = vrot.slane %v163, 1
        %v210 = vrot.slane %v165, 1
        %v211 = vrot.slane %v140, 1
        %v212 = vrot.slane %v142, 1
        %v213 = vrot.slane %v144, 1
        %v214 = vrot.slane %v146, 1
        %v215 = vrot.slane %v148, 1
        %v216 = vrot.slane %v150, 1
        %v217 = vrot.slane %v152, 1
        %v218 = vrot.slane %v154, 1
        %v219 = vrot.slane %v156, 1
        %v220 = vrot.slane %v158, 1
        %v221 = vrot.slane %v160, 1
        %v222 = vrot.slane %v162, 1
        %v223 = vrot.slane %v164, 1
        %v224 = vrot.slane %v166, 1
        %v225 = vlaneseq
        %v226 = vshrl.u32 %v225, 7
        %vm227 = vcmp.lt.s32.totalorder %v226, 7
        %v228 = vsel %vm227, %v197, %v211
        %v229 = vsel %vm227, %v198, %v212
        %v230 = vsel %vm227, %v199, %v213
        %v231 = vsel %vm227, %v200, %v214
        %v232 = vsel %vm227, %v201, %v215
        %v233 = vsel %vm227, %v202, %v216
        %v234 = vsel %vm227, %v203, %v217
        %v235 = vsel %vm227, %v204, %v218
        %v236 = vsel %vm227, %v205, %v219
        %v237 = vsel %vm227, %v206, %v220
        %v238 = vsel %vm227, %v207, %v221
        %v239 = vsel %vm227, %v208, %v222
        %v240 = vsel %vm227, %v209, %v223
        %v241 = vsel %vm227, %v210, %v224
        %v242 = vsel %vm227, %v211, %v197
        %v243 = vsel %vm227, %v212, %v198
        %v244 = vsel %vm227, %v213, %v199
        %v245 = vsel %vm227, %v214, %v200
        %v246 = vsel %vm227, %v215, %v201
        %v247 = vsel %vm227, %v216, %v202
        %v248 = vsel %vm227, %v217, %v203
        %v249 = vsel %vm227, %v218, %v204
        %v250 = vsel %vm227, %v219, %v205
        %v251 = vsel %vm227, %v220, %v206
        %v252 = vsel %vm227, %v221, %v207
        %v253 = vsel %vm227, %v222, %v208
        %v254 = vsel %vm227, %v223, %v209
        %v255 = vsel %vm227, %v224, %v210
        %v256 = vrot.slane %v139, 7
        %v257 = vrot.slane %v141, 7
        %v258 = vrot.slane %v143, 7
        %v259 = vrot.slane %v145, 7
        %v260 = vrot.slane %v147, 7
        %v261 = vrot.slane %v149, 7
        %v262 = vrot.slane %v151, 7
        %v263 = vrot.slane %v153, 7
        %v264 = vrot.slane %v155, 7
        %v265 = vrot.slane %v157, 7
        %v266 = vrot.slane %v159, 7
        %v267 = vrot.slane %v161, 7
        %v268 = vrot.slane %v163, 7
        %v269 = vrot.slane %v165, 7
        %v270 = vrot.slane %v140, 7
        %v271 = vrot.slane %v142, 7
        %v272 = vrot.slane %v144, 7
        %v273 = vrot.slane %v146, 7
        %v274 = vrot.slane %v148, 7
        %v275 = vrot.slane %v150, 7
        %v276 = vrot.slane %v152, 7
        %v277 = vrot.slane %v154, 7
        %v278 = vrot.slane %v156, 7
        %v279 = vrot.slane %v158, 7
        %v280 = vrot.slane %v160, 7
        %v281 = vrot.slane %v162, 7
        %v282 = vrot.slane %v164, 7
        %v283 = vrot.slane %v166, 7
        %vm284 = vcmp.lt.s32.totalorder %v226, 1
        %v285 = vsel %vm284, %v256, %v270
        %v286 = vsel %vm284, %v257, %v271
        %v287 = vsel %vm284, %v258, %v272
        %v288 = vsel %vm284, %v259, %v273
        %v289 = vsel %vm284, %v260, %v274
        %v290 = vsel %vm284, %v261, %v275
        %v291 = vsel %vm284, %v262, %v276
        %v292 = vsel %vm284, %v263, %v277
        %v293 = vsel %vm284, %v264, %v278
        %v294 = vsel %vm284, %v265, %v279
        %v295 = vsel %vm284, %v266, %v280
        %v296 = vsel %vm284, %v267, %v281
        %v297 = vsel %vm284, %v268, %v282
        %v298 = vsel %vm284, %v269, %v283
        %v299 = vsel %vm284, %v270, %v256
        %v300 = vsel %vm284, %v271, %v257
        %v301 = vsel %vm284, %v272, %v258
        %v302 = vsel %vm284, %v273, %v259
        %v303 = vsel %vm284, %v274, %v260
        %v304 = vsel %vm284, %v275, %v261
        %v305 = vsel %vm284, %v276, %v262
        %v306 = vsel %vm284, %v277, %v263
        %v307 = vsel %vm284, %v278, %v264
        %v308 = vsel %vm284, %v279, %v265
        %v309 = vsel %vm284, %v280, %v266
        %v310 = vsel %vm284, %v281, %v267
        %v311 = vsel %vm284, %v282, %v268
        %v312 = vsel %vm284, %v283, %v269
        %v313 = vsub.f32 %v228, %v299
        %v314 = vsub.f32 %v242, %v285
        %v315 = vsub.f32 %v229, %v300
        %v316 = vsub.f32 %v243, %v286
        %v317 = vsub.f32 %v230, %v301
        %v318 = vsub.f32 %v244, %v287
        %v319 = vsub.f32 %v231, %v302
        %v320 = vsub.f32 %v245, %v288
        %v321 = vsub.f32 %v232, %v303
        %v322 = vsub.f32 %v246, %v289
        %v323 = vsub.f32 %v233, %v304
        %v324 = vsub.f32 %v247, %v290
        %v325 = vsub.f32 %v234, %v305
        %v326 = vsub.f32 %v248, %v291
        %v327 = vsub.f32 %v235, %v306
        %v328 = vsub.f32 %v249, %v292
        %v329 = vsub.f32 %v236, %v307
        %v330 = vsub.f32 %v250, %v293
        %v331 = vsub.f32 %v237, %v308
        %v332 = vsub.f32 %v251, %v294
        %v333 = vsub.f32 %v238, %v309
        %v334 = vsub.f32 %v252, %v295
        %v335 = vsub.f32 %v239, %v310
        %v336 = vsub.f32 %v253, %v296
        %v337 = vsub.f32 %v240, %v311
        %v338 = vsub.f32 %v254, %v297
        %v339 = vsub.f32 %v241, %v312
        %v340 = vsub.f32 %v255, %v298
        %vm341 = vcmask 1047680
        %342 = vrot.lane.b32.xlu0 %v139, 16
        %v343 = vpop.permute.xlu0 %342
        %v344 = vsel %vm341, %v343, %v139
        %345 = vrot.lane.b32.xlu0 %v140, 16
        %v346 = vpop.permute.xlu0 %345
        %v347 = vsel %vm341, %v346, %v140
        %348 = vrot.lane.b32.xlu0 %v141, 16
        %v349 = vpop.permute.xlu0 %348
        %v350 = vsel %vm341, %v349, %v141
        %351 = vrot.lane.b32.xlu0 %v142, 16
        %v352 = vpop.permute.xlu0 %351
        %v353 = vsel %vm341, %v352, %v142
        %354 = vrot.lane.b32.xlu0 %v143, 16
        %v355 = vpop.permute.xlu0 %354
        %v356 = vsel %vm341, %v355, %v143
        %357 = vrot.lane.b32.xlu0 %v144, 16
        %v358 = vpop.permute.xlu0 %357
        %v359 = vsel %vm341, %v358, %v144
        %360 = vrot.lane.b32.xlu0 %v145, 16
        %v361 = vpop.permute.xlu0 %360
        %v362 = vsel %vm341, %v361, %v145
        %363 = vrot.lane.b32.xlu0 %v146, 16
        %v364 = vpop.permute.xlu0 %363
        %v365 = vsel %vm341, %v364, %v146
        %366 = vrot.lane.b32.xlu0 %v147, 16
        %v367 = vpop.permute.xlu0 %366
        %v368 = vsel %vm341, %v367, %v147
        %369 = vrot.lane.b32.xlu0 %v148, 16
        %v370 = vpop.permute.xlu0 %369
        %v371 = vsel %vm341, %v370, %v148
        %372 = vrot.lane.b32.xlu0 %v149, 16
        %v373 = vpop.permute.xlu0 %372
        %v374 = vsel %vm341, %v373, %v149
        %375 = vrot.lane.b32.xlu0 %v150, 16
        %v376 = vpop.permute.xlu0 %375
        %v377 = vsel %vm341, %v376, %v150
        %378 = vrot.lane.b32.xlu0 %v151, 16
        %v379 = vpop.permute.xlu0 %378
        %v380 = vsel %vm341, %v379, %v151
        %381 = vrot.lane.b32.xlu0 %v152, 16
        %v382 = vpop.permute.xlu0 %381
        %v383 = vsel %vm341, %v382, %v152
        %384 = vrot.lane.b32.xlu0 %v153, 16
        %v385 = vpop.permute.xlu0 %384
        %v386 = vsel %vm341, %v385, %v153
        %387 = vrot.lane.b32.xlu0 %v154, 16
        %v388 = vpop.permute.xlu0 %387
        %v389 = vsel %vm341, %v388, %v154
        %390 = vrot.lane.b32.xlu0 %v155, 16
        %v391 = vpop.permute.xlu0 %390
        %v392 = vsel %vm341, %v391, %v155
        %393 = vrot.lane.b32.xlu0 %v156, 16
        %v394 = vpop.permute.xlu0 %393
        %v395 = vsel %vm341, %v394, %v156
        %396 = vrot.lane.b32.xlu0 %v157, 16
        %v397 = vpop.permute.xlu0 %396
        %v398 = vsel %vm341, %v397, %v157
        %399 = vrot.lane.b32.xlu0 %v158, 16
        %v400 = vpop.permute.xlu0 %399
        %v401 = vsel %vm341, %v400, %v158
        %402 = vrot.lane.b32.xlu0 %v159, 16
        %v403 = vpop.permute.xlu0 %402
        %v404 = vsel %vm341, %v403, %v159
        %405 = vrot.lane.b32.xlu0 %v160, 16
        %v406 = vpop.permute.xlu0 %405
        %v407 = vsel %vm341, %v406, %v160
        %408 = vrot.lane.b32.xlu0 %v161, 16
        %v409 = vpop.permute.xlu0 %408
        %v410 = vsel %vm341, %v409, %v161
        %411 = vrot.lane.b32.xlu0 %v162, 16
        %v412 = vpop.permute.xlu0 %411
        %v413 = vsel %vm341, %v412, %v162
        %414 = vrot.lane.b32.xlu0 %v163, 16
        %v415 = vpop.permute.xlu0 %414
        %v416 = vsel %vm341, %v415, %v163
        %417 = vrot.lane.b32.xlu0 %v164, 16
        %v418 = vpop.permute.xlu0 %417
        %v419 = vsel %vm341, %v418, %v164
        %420 = vrot.lane.b32.xlu0 %v165, 16
        %v421 = vpop.permute.xlu0 %420
        %v422 = vsel %vm341, %v421, %v165
        %423 = vrot.lane.b32.xlu0 %v166, 16
        %v424 = vpop.permute.xlu0 %423
        %v425 = vsel %vm341, %v424, %v166
        %426 = vrot.lane.b32.xlu0 %v344, 16
        %v427 = vpop.permute.xlu0 %426
        %428 = vrot.lane.b32.xlu0 %v347, 16
        %v429 = vpop.permute.xlu0 %428
        %430 = vrot.lane.b32.xlu0 %v350, 16
        %v431 = vpop.permute.xlu0 %430
        %432 = vrot.lane.b32.xlu0 %v353, 16
        %v433 = vpop.permute.xlu0 %432
        %434 = vrot.lane.b32.xlu0 %v356, 16
        %v435 = vpop.permute.xlu0 %434
        %436 = vrot.lane.b32.xlu0 %v359, 16
        %v437 = vpop.permute.xlu0 %436
        %438 = vrot.lane.b32.xlu0 %v362, 16
        %v439 = vpop.permute.xlu0 %438
        %440 = vrot.lane.b32.xlu0 %v365, 16
        %v441 = vpop.permute.xlu0 %440
        %442 = vrot.lane.b32.xlu0 %v368, 16
        %v443 = vpop.permute.xlu0 %442
        %444 = vrot.lane.b32.xlu0 %v371, 16
        %v445 = vpop.permute.xlu0 %444
        %446 = vrot.lane.b32.xlu0 %v374, 16
        %v447 = vpop.permute.xlu0 %446
        %448 = vrot.lane.b32.xlu0 %v377, 16
        %v449 = vpop.permute.xlu0 %448
        %450 = vrot.lane.b32.xlu0 %v380, 16
        %v451 = vpop.permute.xlu0 %450
        %452 = vrot.lane.b32.xlu0 %v383, 16
        %v453 = vpop.permute.xlu0 %452
        %454 = vrot.lane.b32.xlu0 %v386, 16
        %v455 = vpop.permute.xlu0 %454
        %456 = vrot.lane.b32.xlu0 %v389, 16
        %v457 = vpop.permute.xlu0 %456
        %458 = vrot.lane.b32.xlu0 %v392, 16
        %v459 = vpop.permute.xlu0 %458
        %460 = vrot.lane.b32.xlu0 %v395, 16
        %v461 = vpop.permute.xlu0 %460
        %462 = vrot.lane.b32.xlu0 %v398, 16
        %v463 = vpop.permute.xlu0 %462
        %464 = vrot.lane.b32.xlu0 %v401, 16
        %v465 = vpop.permute.xlu0 %464
        %466 = vrot.lane.b32.xlu0 %v404, 16
        %v467 = vpop.permute.xlu0 %466
        %468 = vrot.lane.b32.xlu0 %v407, 16
        %v469 = vpop.permute.xlu0 %468
        %470 = vrot.lane.b32.xlu0 %v410, 16
        %v471 = vpop.permute.xlu0 %470
        %472 = vrot.lane.b32.xlu0 %v413, 16
        %v473 = vpop.permute.xlu0 %472
        %474 = vrot.lane.b32.xlu0 %v416, 16
        %v475 = vpop.permute.xlu0 %474
        %476 = vrot.lane.b32.xlu0 %v419, 16
        %v477 = vpop.permute.xlu0 %476
        %478 = vrot.lane.b32.xlu0 %v422, 16
        %v479 = vpop.permute.xlu0 %478
        %480 = vrot.lane.b32.xlu0 %v425, 16
        %v481 = vpop.permute.xlu0 %480
        %v482 = vsel %vm341, %v427, %v139
        %v483 = vsel %vm341, %v429, %v140
        %v484 = vsel %vm341, %v431, %v141
        %v485 = vsel %vm341, %v433, %v142
        %v486 = vsel %vm341, %v435, %v143
        %v487 = vsel %vm341, %v437, %v144
        %v488 = vsel %vm341, %v439, %v145
        %v489 = vsel %vm341, %v441, %v146
        %v490 = vsel %vm341, %v443, %v147
        %v491 = vsel %vm341, %v445, %v148
        %v492 = vsel %vm341, %v447, %v149
        %v493 = vsel %vm341, %v449, %v150
        %v494 = vsel %vm341, %v451, %v151
        %v495 = vsel %vm341, %v453, %v152
        %v496 = vsel %vm341, %v455, %v153
        %v497 = vsel %vm341, %v457, %v154
        %v498 = vsel %vm341, %v459, %v155
        %v499 = vsel %vm341, %v461, %v156
        %v500 = vsel %vm341, %v463, %v157
        %v501 = vsel %vm341, %v465, %v158
        %v502 = vsel %vm341, %v467, %v159
        %v503 = vsel %vm341, %v469, %v160
        %v504 = vsel %vm341, %v471, %v161
        %v505 = vsel %vm341, %v473, %v162
        %v506 = vsel %vm341, %v475, %v163
        %v507 = vsel %vm341, %v477, %v164
        %v508 = vsel %vm341, %v479, %v165
        %v509 = vsel %vm341, %v481, %v166
        %538 = vrot.lane.b32.xlu0 %v482, 114
        %v539 = vpop.permute.xlu0 %538
        %540 = vrot.lane.b32.xlu0 %v483, 114
        %v541 = vpop.permute.xlu0 %540
        %542 = vrot.lane.b32.xlu0 %v484, 114
        %v543 = vpop.permute.xlu0 %542
        %544 = vrot.lane.b32.xlu0 %v485, 114
        %v545 = vpop.permute.xlu0 %544
        %546 = vrot.lane.b32.xlu0 %v486, 114
        %v547 = vpop.permute.xlu0 %546
        %548 = vrot.lane.b32.xlu0 %v487, 114
        %v549 = vpop.permute.xlu0 %548
        %550 = vrot.lane.b32.xlu0 %v488, 114
        %v551 = vpop.permute.xlu0 %550
        %552 = vrot.lane.b32.xlu0 %v489, 114
        %v553 = vpop.permute.xlu0 %552
        %554 = vrot.lane.b32.xlu0 %v490, 114
        %v555 = vpop.permute.xlu0 %554
        %556 = vrot.lane.b32.xlu0 %v491, 114
        %v557 = vpop.permute.xlu0 %556
        %558 = vrot.lane.b32.xlu0 %v492, 114
        %v559 = vpop.permute.xlu0 %558
        %560 = vrot.lane.b32.xlu0 %v493, 114
        %v561 = vpop.permute.xlu0 %560
        %562 = vrot.lane.b32.xlu0 %v494, 114
        %v563 = vpop.permute.xlu0 %562
        %564 = vrot.lane.b32.xlu0 %v495, 114
        %v565 = vpop.permute.xlu0 %564
        %566 = vrot.lane.b32.xlu0 %v496, 114
        %v567 = vpop.permute.xlu0 %566
        %568 = vrot.lane.b32.xlu0 %v497, 114
        %v569 = vpop.permute.xlu0 %568
        %570 = vrot.lane.b32.xlu0 %v498, 114
        %v571 = vpop.permute.xlu0 %570
        %572 = vrot.lane.b32.xlu0 %v499, 114
        %v573 = vpop.permute.xlu0 %572
        %574 = vrot.lane.b32.xlu0 %v500, 114
        %v575 = vpop.permute.xlu0 %574
        %576 = vrot.lane.b32.xlu0 %v501, 114
        %v577 = vpop.permute.xlu0 %576
        %578 = vrot.lane.b32.xlu0 %v502, 114
        %v579 = vpop.permute.xlu0 %578
        %580 = vrot.lane.b32.xlu0 %v503, 114
        %v581 = vpop.permute.xlu0 %580
        %582 = vrot.lane.b32.xlu0 %v504, 114
        %v583 = vpop.permute.xlu0 %582
        %584 = vrot.lane.b32.xlu0 %v505, 114
        %v585 = vpop.permute.xlu0 %584
        %586 = vrot.lane.b32.xlu0 %v506, 114
        %v587 = vpop.permute.xlu0 %586
        %588 = vrot.lane.b32.xlu0 %v507, 114
        %v589 = vpop.permute.xlu0 %588
        %590 = vrot.lane.b32.xlu0 %v508, 114
        %v591 = vpop.permute.xlu0 %590
        %592 = vrot.lane.b32.xlu0 %v509, 114
        %v593 = vpop.permute.xlu0 %592
        %v622 = vsub.f32 %v482, %v539
        %v623 = vsub.f32 %v483, %v541
        %v624 = vsub.f32 %v484, %v543
        %v625 = vsub.f32 %v485, %v545
        %v626 = vsub.f32 %v486, %v547
        %v627 = vsub.f32 %v487, %v549
        %v628 = vsub.f32 %v488, %v551
        %v629 = vsub.f32 %v489, %v553
        %v630 = vsub.f32 %v490, %v555
        %v631 = vsub.f32 %v491, %v557
        %v632 = vsub.f32 %v492, %v559
        %v633 = vsub.f32 %v493, %v561
        %v634 = vsub.f32 %v494, %v563
        %v635 = vsub.f32 %v495, %v565
        %v636 = vsub.f32 %v496, %v567
        %v637 = vsub.f32 %v497, %v569
        %v638 = vsub.f32 %v498, %v571
        %v639 = vsub.f32 %v499, %v573
        %v640 = vsub.f32 %v500, %v575
        %v641 = vsub.f32 %v501, %v577
        %v642 = vsub.f32 %v502, %v579
        %v643 = vsub.f32 %v503, %v581
        %v644 = vsub.f32 %v504, %v583
        %v645 = vsub.f32 %v505, %v585
        %v646 = vsub.f32 %v506, %v587
        %v647 = vsub.f32 %v507, %v589
        %v648 = vsub.f32 %v508, %v591
        %v649 = vsub.f32 %v509, %v593
        %v650 = vand.u32 2147483647, %v169
        %v651 = vand.u32 2147483647, %v170
        %v652 = vand.u32 2147483647, %v171
        %v653 = vand.u32 2147483647, %v172
        %v654 = vand.u32 2147483647, %v173
        %v655 = vand.u32 2147483647, %v174
        %v656 = vand.u32 2147483647, %v175
        %v657 = vand.u32 2147483647, %v176
        %v658 = vand.u32 2147483647, %v177
        %v659 = vand.u32 2147483647, %v178
        %v660 = vand.u32 2147483647, %v179
        %v661 = vand.u32 2147483647, %v180
        %v662 = vand.u32 2147483647, %v181
        %v663 = vand.u32 2147483647, %v182
        %v664 = vand.u32 2147483647, %v183
        %v665 = vand.u32 2147483647, %v184
        %v666 = vand.u32 2147483647, %v185
        %v667 = vand.u32 2147483647, %v186
        %v668 = vand.u32 2147483647, %v187
        %v669 = vand.u32 2147483647, %v188
        %v670 = vand.u32 2147483647, %v189
        %v671 = vand.u32 2147483647, %v190
        %v672 = vand.u32 2147483647, %v191
        %v673 = vand.u32 2147483647, %v192
        %v674 = vand.u32 2147483647, %v193
        %v675 = vand.u32 2147483647, %v194
        %v676 = vand.u32 2147483647, %v195
        %v677 = vand.u32 2147483647, %v196
        %v678 = vand.u32 2147483647, %v313
        %v679 = vand.u32 2147483647, %v314
        %v680 = vand.u32 2147483647, %v315
        %v681 = vand.u32 2147483647, %v316
        %v682 = vand.u32 2147483647, %v317
        %v683 = vand.u32 2147483647, %v318
        %v684 = vand.u32 2147483647, %v319
        %v685 = vand.u32 2147483647, %v320
        %v686 = vand.u32 2147483647, %v321
        %v687 = vand.u32 2147483647, %v322
        %v688 = vand.u32 2147483647, %v323
        %v689 = vand.u32 2147483647, %v324
        %v690 = vand.u32 2147483647, %v325
        %v691 = vand.u32 2147483647, %v326
        %v692 = vand.u32 2147483647, %v327
        %v693 = vand.u32 2147483647, %v328
        %v694 = vand.u32 2147483647, %v329
        %v695 = vand.u32 2147483647, %v330
        %v696 = vand.u32 2147483647, %v331
        %v697 = vand.u32 2147483647, %v332
        %v698 = vand.u32 2147483647, %v333
        %v699 = vand.u32 2147483647, %v334
        %v700 = vand.u32 2147483647, %v335
        %v701 = vand.u32 2147483647, %v336
        %v702 = vand.u32 2147483647, %v337
        %v703 = vand.u32 2147483647, %v338
        %v704 = vand.u32 2147483647, %v339
        %v705 = vand.u32 2147483647, %v340
        %v706 = vadd.f32 %v650, %v678
        %v707 = vadd.f32 %v651, %v679
        %v708 = vadd.f32 %v652, %v680
        %v709 = vadd.f32 %v653, %v681
        %v710 = vadd.f32 %v654, %v682
        %v711 = vadd.f32 %v655, %v683
        %v712 = vadd.f32 %v656, %v684
        %v713 = vadd.f32 %v657, %v685
        %v714 = vadd.f32 %v658, %v686
        %v715 = vadd.f32 %v659, %v687
        %v716 = vadd.f32 %v660, %v688
        %v717 = vadd.f32 %v661, %v689
        %v718 = vadd.f32 %v662, %v690
        %v719 = vadd.f32 %v663, %v691
        %v720 = vadd.f32 %v664, %v692
        %v721 = vadd.f32 %v665, %v693
        %v722 = vadd.f32 %v666, %v694
        %v723 = vadd.f32 %v667, %v695
        %v724 = vadd.f32 %v668, %v696
        %v725 = vadd.f32 %v669, %v697
        %v726 = vadd.f32 %v670, %v698
        %v727 = vadd.f32 %v671, %v699
        %v728 = vadd.f32 %v672, %v700
        %v729 = vadd.f32 %v673, %v701
        %v730 = vadd.f32 %v674, %v702
        %v731 = vadd.f32 %v675, %v703
        %v732 = vadd.f32 %v676, %v704
        %v733 = vadd.f32 %v677, %v705
        %v734 = vand.u32 2147483647, %v622
        %v735 = vand.u32 2147483647, %v623
        %v736 = vand.u32 2147483647, %v624
        %v737 = vand.u32 2147483647, %v625
        %v738 = vand.u32 2147483647, %v626
        %v739 = vand.u32 2147483647, %v627
        %v740 = vand.u32 2147483647, %v628
        %v741 = vand.u32 2147483647, %v629
        %v742 = vand.u32 2147483647, %v630
        %v743 = vand.u32 2147483647, %v631
        %v744 = vand.u32 2147483647, %v632
        %v745 = vand.u32 2147483647, %v633
        %v746 = vand.u32 2147483647, %v634
        %v747 = vand.u32 2147483647, %v635
        %v748 = vand.u32 2147483647, %v636
        %v749 = vand.u32 2147483647, %v637
        %v750 = vand.u32 2147483647, %v638
        %v751 = vand.u32 2147483647, %v639
        %v752 = vand.u32 2147483647, %v640
        %v753 = vand.u32 2147483647, %v641
        %v754 = vand.u32 2147483647, %v642
        %v755 = vand.u32 2147483647, %v643
        %v756 = vand.u32 2147483647, %v644
        %v757 = vand.u32 2147483647, %v645
        %v758 = vand.u32 2147483647, %v646
        %v759 = vand.u32 2147483647, %v647
        %v760 = vand.u32 2147483647, %v648
        %v761 = vand.u32 2147483647, %v649
        %790 = vrot.lane.b32.xlu0 %v734, 127
        %v791 = vpop.permute.xlu0 %790
        %792 = vrot.lane.b32.xlu0 %v735, 127
        %v793 = vpop.permute.xlu0 %792
        %794 = vrot.lane.b32.xlu0 %v736, 127
        %v795 = vpop.permute.xlu0 %794
        %796 = vrot.lane.b32.xlu0 %v737, 127
        %v797 = vpop.permute.xlu0 %796
        %798 = vrot.lane.b32.xlu0 %v738, 127
        %v799 = vpop.permute.xlu0 %798
        %800 = vrot.lane.b32.xlu0 %v739, 127
        %v801 = vpop.permute.xlu0 %800
        %802 = vrot.lane.b32.xlu0 %v740, 127
        %v803 = vpop.permute.xlu0 %802
        %804 = vrot.lane.b32.xlu0 %v741, 127
        %v805 = vpop.permute.xlu0 %804
        %806 = vrot.lane.b32.xlu0 %v742, 127
        %v807 = vpop.permute.xlu0 %806
        %808 = vrot.lane.b32.xlu0 %v743, 127
        %v809 = vpop.permute.xlu0 %808
        %810 = vrot.lane.b32.xlu0 %v744, 127
        %v811 = vpop.permute.xlu0 %810
        %812 = vrot.lane.b32.xlu0 %v745, 127
        %v813 = vpop.permute.xlu0 %812
        %814 = vrot.lane.b32.xlu0 %v746, 127
        %v815 = vpop.permute.xlu0 %814
        %816 = vrot.lane.b32.xlu0 %v747, 127
        %v817 = vpop.permute.xlu0 %816
        %818 = vrot.lane.b32.xlu0 %v748, 127
        %v819 = vpop.permute.xlu0 %818
        %820 = vrot.lane.b32.xlu0 %v749, 127
        %v821 = vpop.permute.xlu0 %820
        %822 = vrot.lane.b32.xlu0 %v750, 127
        %v823 = vpop.permute.xlu0 %822
        %824 = vrot.lane.b32.xlu0 %v751, 127
        %v825 = vpop.permute.xlu0 %824
        %826 = vrot.lane.b32.xlu0 %v752, 127
        %v827 = vpop.permute.xlu0 %826
        %828 = vrot.lane.b32.xlu0 %v753, 127
        %v829 = vpop.permute.xlu0 %828
        %830 = vrot.lane.b32.xlu0 %v754, 127
        %v831 = vpop.permute.xlu0 %830
        %832 = vrot.lane.b32.xlu0 %v755, 127
        %v833 = vpop.permute.xlu0 %832
        %834 = vrot.lane.b32.xlu0 %v756, 127
        %v835 = vpop.permute.xlu0 %834
        %836 = vrot.lane.b32.xlu0 %v757, 127
        %v837 = vpop.permute.xlu0 %836
        %838 = vrot.lane.b32.xlu0 %v758, 127
        %v839 = vpop.permute.xlu0 %838
        %840 = vrot.lane.b32.xlu0 %v759, 127
        %v841 = vpop.permute.xlu0 %840
        %842 = vrot.lane.b32.xlu0 %v760, 127
        %v843 = vpop.permute.xlu0 %842
        %844 = vrot.lane.b32.xlu0 %v761, 127
        %v845 = vpop.permute.xlu0 %844
        %v874 = vadd.f32 %v706, %v791
        %v875 = vadd.f32 %v707, %v793
        %v876 = vadd.f32 %v708, %v795
        %v877 = vadd.f32 %v709, %v797
        %v878 = vadd.f32 %v710, %v799
        %v879 = vadd.f32 %v711, %v801
        %v880 = vadd.f32 %v712, %v803
        %v881 = vadd.f32 %v713, %v805
        %v882 = vadd.f32 %v714, %v807
        %v883 = vadd.f32 %v715, %v809
        %v884 = vadd.f32 %v716, %v811
        %v885 = vadd.f32 %v717, %v813
        %v886 = vadd.f32 %v718, %v815
        %v887 = vadd.f32 %v719, %v817
        %v888 = vadd.f32 %v720, %v819
        %v889 = vadd.f32 %v721, %v821
        %v890 = vadd.f32 %v722, %v823
        %v891 = vadd.f32 %v723, %v825
        %v892 = vadd.f32 %v724, %v827
        %v893 = vadd.f32 %v725, %v829
        %v894 = vadd.f32 %v726, %v831
        %v895 = vadd.f32 %v727, %v833
        %v896 = vadd.f32 %v728, %v835
        %v897 = vadd.f32 %v729, %v837
        %v898 = vadd.f32 %v730, %v839
        %v899 = vadd.f32 %v731, %v841
        %v900 = vadd.f32 %v732, %v843
        %v901 = vadd.f32 %v733, %v845
        %vm902 = vcmask 130048
        %v903 = vsel %vm902, %v874, 0.0
        %v904 = vsel %vm902, %v876, 0.0
        %v905 = vadd.f32 %v903, %v904
        %v906 = vsel %vm902, %v878, 0.0
        %v907 = vadd.f32 %v905, %v906
        %v908 = vsel %vm902, %v880, 0.0
        %v909 = vadd.f32 %v907, %v908
        %v910 = vsel %vm902, %v882, 0.0
        %v911 = vadd.f32 %v909, %v910
        %v912 = vsel %vm902, %v884, 0.0
        %v913 = vadd.f32 %v911, %v912
        %v914 = vsel %vm902, %v886, 0.0
        %v915 = vadd.f32 %v913, %v914
        %v916 = vsel %vm902, %v888, 0.0
        %v917 = vadd.f32 %v915, %v916
        %v918 = vsel %vm902, %v890, 0.0
        %v919 = vadd.f32 %v917, %v918
        %v920 = vsel %vm902, %v892, 0.0
        %v921 = vadd.f32 %v919, %v920
        %v922 = vsel %vm902, %v894, 0.0
        %v923 = vadd.f32 %v921, %v922
        %v924 = vsel %vm902, %v896, 0.0
        %v925 = vadd.f32 %v923, %v924
        %v926 = vsel %vm902, %v898, 0.0
        %v927 = vadd.f32 %v925, %v926
        %v928 = vsel %vm902, %v900, 0.0
        %v929 = vadd.f32 %v927, %v928
        %v930 = vsel %vm902, %v875, 0.0
        %v931 = vsel %vm902, %v877, 0.0
        %v932 = vadd.f32 %v930, %v931
        %v933 = vsel %vm902, %v879, 0.0
        %v934 = vadd.f32 %v932, %v933
        %v935 = vsel %vm902, %v881, 0.0
        %v936 = vadd.f32 %v934, %v935
        %v937 = vsel %vm902, %v883, 0.0
        %v938 = vadd.f32 %v936, %v937
        %v939 = vsel %vm902, %v885, 0.0
        %v940 = vadd.f32 %v938, %v939
        %v941 = vsel %vm902, %v887, 0.0
        %v942 = vadd.f32 %v940, %v941
        %v943 = vsel %vm902, %v889, 0.0
        %v944 = vadd.f32 %v942, %v943
        %v945 = vsel %vm902, %v891, 0.0
        %v946 = vadd.f32 %v944, %v945
        %v947 = vsel %vm902, %v893, 0.0
        %v948 = vadd.f32 %v946, %v947
        %v949 = vsel %vm902, %v895, 0.0
        %v950 = vadd.f32 %v948, %v949
        %v951 = vsel %vm902, %v897, 0.0
        %v952 = vadd.f32 %v950, %v951
        %v953 = vsel %vm902, %v899, 0.0
        %v954 = vadd.f32 %v952, %v953
        %v955 = vsel %vm902, %v901, 0.0
        %v956 = vadd.f32 %v954, %v955
        %v957 = vadd.f32 %v929, 0.0
        %v958 = vadd.f32 %v956, 0.0
        %v959 = vadd.s32 %v226, 8
        %v960 = vlaneseq
        %v961 = vand.u32 %v960, 127
        %vm962 = vcmp.ge.s32.totalorder %v226, 1
        %vm963 = vcmp.ge.s32.totalorder %v959, 1
        %vm964 = vcmp.le.s32.totalorder %v226, 14
        %vm965 = vcmp.le.s32.totalorder %v959, 14
        %vm966 = vmand %vm962, %vm964
        %vm967 = vmand %vm963, %vm965
        %vm968 = vcmp.ge.s32.totalorder %v961, 1
        %vm969 = vmand %vm966, %vm968
        %vm970 = vmand %vm967, %vm968
        %vm971 = vcmp.le.s32.totalorder %v961, 14
        %vm972 = vmand %vm969, %vm971
        %vm973 = vmand %vm970, %vm971
        %v974 = vsel %vm972, %v957, 0.0
        %v975 = vsel %vm973, %v958, 0.0
        %976 = vst.msk [vmem:[%s136] sm:$0xff] %vm902, %v974
        %977 = vst.msk [vmem:[%s136 + $0x8] sm:$0xff] %vm902, %v975
        %s978 = sand.u32 %s52, 1
        %s979 = scalar_lea.sflag [#allocation4], %s978
        %s980 = sand.u32 %s52, 1
        %s981 = smul.addr %s980, 16
        %s982 = scalar_lea.vmem [#allocation5], %s981
        // Predicated region
        $region29: #{tpu_custom_call.1} parent=23 // pred_check
          %p983 = pneg %p62
        $region30: #{tpu_custom_call.1} parent=23 // pred_check_branch
          %985 = sbr.rel (%p983) target = $region32
        $region31: #{tpu_custom_call.1} parent=23 // pred_region
          %987 = vsyncadd %s979, 0
          %s988 = smul.addr %s18, 2
          %s989 = smul.addr %s988, 8
          %s990 = scalar_lea.hbm %s1, %s989
          %s991 = sshll.u32 %s982, 4
          %s992 = int_to_ptr.vmem [resolvable:$true] %s991
          %s993 = sshll.u32 %s990, 4
          %s994 = int_to_ptr.hbm [resolvable:$true] %s993
          %999 = dma.vmem_to_hbm [thread:$0]  %s992, 256, %s994, %s979, 128, 128, 8
        $region32: #{tpu_custom_call.1} parent=23 // pred_fallthru
          _
      $region24: #{tpu_custom_call.1} parent=5 // pred_fallthru
        _
      %p1000 = scmp.le.s32.totalorder 2, %s13
      // Predicated region
      $region33: #{tpu_custom_call.1} parent=5 // pred_check
        %p1001 = pneg %p1000
      $region34: #{tpu_custom_call.1} parent=5 // pred_check_branch
        %1003 = sbr.rel (%p1001) target = $region36
      $region35: #{tpu_custom_call.1} parent=5 // pred_region
        %s1004 = ssub.s32 %s13, 2
        // Predicated region
        $region37: #{tpu_custom_call.1} parent=35 // pred_check
          %p1005 = pneg %p68
        $region38: #{tpu_custom_call.1} parent=35 // pred_check_branch
          %1007 = sbr.rel (%p1005) target = $region40
        $region39: #{tpu_custom_call.1} parent=35 // pred_region
          %s1008 = sand.u32 %s53, 1
          %s1009 = scalar_lea.sflag [#allocation4], %s1008
          %s1010 = sand.u32 %s53, 1
          %s1011 = smul.addr %s1010, 16
          %s1012 = scalar_lea.vmem [#allocation5], %s1011
          %1014 = dma.done %s1009, 256
        $region40: #{tpu_custom_call.1} parent=35 // pred_fallthru
          _
      $region36: #{tpu_custom_call.1} parent=5 // pred_fallthru
        _
    $region6: #{tpu_custom_call.1} parent=1 // loop_footer
      %s17 = sadd.s32 1, %s13
    $region7: #{tpu_custom_call.1} parent=1 // loop_footer_branch
      %12 = sbr.rel target = $region3
    $region8: #{tpu_custom_call.1} parent=1 // loop_exit
      _
    %1015 = vsyncpa [#allocation3], 1
    %s1016 = scalar_lea.sflag [#allocation3], 1
    %1017 = vsyncpa %s1016, 1
    %1018 = vsyncpa [#allocation4], 1
    %s1019 = scalar_lea.sflag [#allocation4], 1
    %1020 = vsyncpa %s1019, 1

</llo_original>
